<compile_context>
chip_gen: v6e
topology: v6e:2x2x1
jax: 0.10.0
libtpu: 0.0.40
codegen_flags: <defaults>
</compile_context>

<pallas_src>
import functools

import jax
import jax.numpy as jnp
from jax.experimental import pallas as pl
from jax.experimental.pallas import tpu as pltpu


_VMEM_INPUT_BUDGET = 24 * 1024 * 1024   # double-buffered a/p/n working set
_VMEM_LIMIT_BYTES = 32 * 1024 * 1024    # explicit scoped limit (safe on v5e..v7x)
_TARGET_STEP_BYTES = 4 * 1024 * 1024    # combined a+p+n bytes per grid step


def _round_up(x, m):
    return (x + m - 1) // m * m


def _triplet_kernel(a_ref, p_ref, n_ref, o_ref, *, margin, squared, soft,
                    batch, block_rows, needs_mask):
    a = a_ref[...].astype(jnp.float32)
    p = p_ref[...].astype(jnp.float32)
    n = n_ref[...].astype(jnp.float32)

    dap = a - p
    dan = a - n
    if squared:
        # Fused single row reduction: sum((a-p)^2 - (a-n)^2) == d_ap^2 - d_an^2.
        diff = jnp.sum(dap * dap - dan * dan, axis=1, keepdims=True)   # (tb, 1)
    else:
        sq_ap = jnp.sum(dap * dap, axis=1, keepdims=True)              # (tb, 1)
        sq_an = jnp.sum(dan * dan, axis=1, keepdims=True)              # (tb, 1)
        diff = jnp.sqrt(sq_ap) - jnp.sqrt(sq_an)

    diff = diff + jnp.float32(margin)
    per_row = jax.nn.softplus(diff) if soft else jnp.maximum(diff, jnp.float32(0.0))

    def _store(v):
        o_ref[...] = jnp.full(o_ref.shape, v, dtype=o_ref.dtype)

    if needs_mask:
        # Only the final tile can contain out-of-range (garbage) rows; mask them
        # after per_row is computed so NaN/Inf from uninitialized data is discarded.
        tile_idx = pl.program_id(0)
        last = pl.num_programs(0) - 1

        @pl.when(tile_idx == last)
        def _():
            row_ids = tile_idx * block_rows + jax.lax.broadcasted_iota(
                jnp.int32, per_row.shape, 0)
            _store(jnp.sum(jnp.where(row_ids < batch, per_row, 0.0)))

        @pl.when(tile_idx != last)
        def _():
            _store(jnp.sum(per_row))
    else:
        _store(jnp.sum(per_row))


def triplet_loss(a, p, n, *, margin=1.0, squared=False, soft=False,
                 block_rows=None):
    """Computes TripletLoss.forward(a, p, n) on TPU via Pallas."""
    assert a.shape == p.shape == n.shape and a.ndim == 2
    B, D = a.shape
    itemsize = jnp.dtype(a.dtype).itemsize

    # Tile rows: large enough to hit ~4 MiB of combined input bytes per grid
    # step (amortizes fixed per-step overhead), capped so the double-buffered
    # a/p/n working set stays under the VMEM budget, and never larger than the
    # (8-rounded) batch.
    per_row_bytes = 3 * D * itemsize
    if block_rows is None:
        tb_vmem = max(8, (_VMEM_INPUT_BUDGET // (2 * per_row_bytes)) // 8 * 8)
        tb_target = max(8, _round_up(pl.cdiv(_TARGET_STEP_BYTES, per_row_bytes), 8))
        tb = min(tb_vmem, tb_target, _round_up(B, 8))
    else:
        tb = max(8, _round_up(block_rows, 8))

    n_tiles = pl.cdiv(B, tb)
    needs_mask = (B % tb) != 0

    kernel = functools.partial(
        _triplet_kernel, margin=margin, squared=squared, soft=soft,
        batch=B, block_rows=tb, needs_mask=needs_mask)

    in_spec = pl.BlockSpec((tb, D), lambda i: (i, 0))

    flops = 6 * B * D + 8 * B
    transcendentals = (0 if squared else 2 * B) + (B if soft else 0)
    cost = pl.CostEstimate(
        flops=flops,
        transcendentals=transcendentals,
        bytes_accessed=3 * B * D * itemsize + n_tiles * 8 * 128 * 4)

    # One (1, 8, 128) partial-sum block per batch tile ("parallel" grid axis:
    # shards across both v7x TensorCores, serial loop on v5e/v6e).
    partials = pl.pallas_call(
        kernel,
        out_shape=jax.ShapeDtypeStruct((n_tiles, 8, 128), jnp.float32),
        grid=(n_tiles,),
        in_specs=[in_spec, in_spec, in_spec],
        out_specs=pl.BlockSpec((1, 8, 128), lambda i: (i, 0, 0)),
        compiler_params=pltpu.CompilerParams(
            dimension_semantics=("parallel",),
            vmem_limit_bytes=_VMEM_LIMIT_BYTES,
        ),
        cost_estimate=cost,
    )(a, p, n)

    return jnp.sum(partials[:, 0, 0]) / jnp.float32(B)


def _reference(a, p, n, *, margin=1.0, squared=False, soft=False):
    a = a.astype(jnp.float32)
    p = p.astype(jnp.float32)
    n = n.astype(jnp.float32)
    d_ap = jnp.linalg.norm(a - p, axis=1)
    d_an = jnp.linalg.norm(a - n, axis=1)
    if squared:
        d_ap, d_an = d_ap**2, d_an**2
    diff = d_ap - d_an + margin
    per_row = jax.nn.softplus(diff) if soft else jnp.maximum(diff, 0.0)
    return jnp.mean(per_row)


if __name__ == "__main__":
    key = jax.random.PRNGKey(0)
    ka, kp, kn = jax.random.split(key, 3)

    # Case 1: small batch of 32-dim embeddings, default hinge loss.
    B, D = 8, 32
    a = jax.random.normal(ka, (B, D), dtype=jnp.float32)
    p = jax.random.normal(kp, (B, D), dtype=jnp.float32)
    n = jax.random.normal(kn, (B, D), dtype=jnp.float32)

    loss = jax.block_until_ready(triplet_loss(a, p, n, margin=1.0))
    ref = _reference(a, p, n, margin=1.0)
    assert jnp.allclose(loss, ref, atol=1e-5, rtol=1e-5), (loss, ref)

    # Case 2: ragged batch (masking of the partial tile) + squared/soft variants.
    B2, D2 = 5, 48
    a2 = jax.random.normal(ka, (B2, D2), dtype=jnp.float32)
    p2 = jax.random.normal(kp, (B2, D2), dtype=jnp.float32)
    n2 = jax.random.normal(kn, (B2, D2), dtype=jnp.float32)
    for sq, so in ((False, False), (True, False), (False, True)):
        got = jax.block_until_ready(
            triplet_loss(a2, p2, n2, margin=0.5, squared=sq, soft=so))
        want = _reference(a2, p2, n2, margin=0.5, squared=sq, soft=so)
        assert jnp.allclose(got, want, atol=1e-5, rtol=1e-5), (sq, so, got, want)

    # Case 3: force a small tile to exercise the multi-tile "parallel" grid and
    # the last-tile mask path at small shapes.
    B3, D3 = 37, 32
    a3 = jax.random.normal(ka, (B3, D3), dtype=jnp.float32)
    p3 = jax.random.normal(kp, (B3, D3), dtype=jnp.float32)
    n3 = jax.random.normal(kn, (B3, D3), dtype=jnp.float32)
    got3 = jax.block_until_ready(triplet_loss(a3, p3, n3, margin=1.0, block_rows=16))
    want3 = _reference(a3, p3, n3, margin=1.0)
    assert jnp.allclose(got3, want3, atol=1e-5, rtol=1e-5), (got3, want3)

    print("KERNEL_OK")
</pallas_src>

<mosaic_0001>
module attributes {stable_mosaic.version = 11 : i64} {
  func.func @_triplet_kernel(%arg0: i32, %arg1: memref<8x32xf32, #tpu.memory_space<vmem>>, %arg2: memref<8x32xf32, #tpu.memory_space<vmem>>, %arg3: memref<8x32xf32, #tpu.memory_space<vmem>>, %arg4: memref<1x8x128xf32, #tpu.memory_space<vmem>>) attributes {dimension_semantics = [#tpu.dimension_semantics<parallel>], iteration_bounds = array<i64: 1>, scalar_prefetch = 0 : i64, scratch_operands = 0 : i64, tpu.core_type = #tpu.core_type<tc>, window_params = [{transform_indices = @transform_0, window_bounds = array<i64: 8, 32>}, {transform_indices = @transform_1, window_bounds = array<i64: 8, 32>}, {transform_indices = @transform_2, window_bounds = array<i64: 8, 32>}, {transform_indices = @transform_3, window_bounds = array<i64: 1, 8, 128>}]} {
    %c0 = arith.constant 0 : index
    %c0_0 = arith.constant 0 : index
    %0 = vector.load %arg1[%c0, %c0_0] : memref<8x32xf32, #tpu.memory_space<vmem>>, vector<8x32xf32>
    %c0_1 = arith.constant 0 : index
    %c0_2 = arith.constant 0 : index
    %1 = vector.load %arg2[%c0_1, %c0_2] : memref<8x32xf32, #tpu.memory_space<vmem>>, vector<8x32xf32>
    %c0_3 = arith.constant 0 : index
    %c0_4 = arith.constant 0 : index
    %2 = vector.load %arg3[%c0_3, %c0_4] : memref<8x32xf32, #tpu.memory_space<vmem>>, vector<8x32xf32>
    %3 = arith.subf %0, %1 : vector<8x32xf32>
    %4 = arith.subf %0, %2 : vector<8x32xf32>
    %5 = arith.mulf %3, %3 : vector<8x32xf32>
    %cst = arith.constant dense<0.000000e+00> : vector<8xf32>
    %6 = vector.multi_reduction <add>, %5, %cst [1] : vector<8x32xf32> to vector<8xf32>
    %7 = vector.shape_cast %6 : vector<8xf32> to vector<8x1xf32>
    %8 = arith.mulf %4, %4 : vector<8x32xf32>
    %cst_5 = arith.constant dense<0.000000e+00> : vector<8xf32>
    %9 = vector.multi_reduction <add>, %8, %cst_5 [1] : vector<8x32xf32> to vector<8xf32>
    %10 = vector.shape_cast %9 : vector<8xf32> to vector<8x1xf32>
    %11 = math.sqrt %7 : vector<8x1xf32>
    %12 = math.sqrt %10 : vector<8x1xf32>
    %13 = arith.subf %11, %12 : vector<8x1xf32>
    %cst_6 = arith.constant 1.000000e+00 : f32
    %14 = vector.broadcast %cst_6 : f32 to vector<8x1xf32>
    %15 = arith.addf %13, %14 : vector<8x1xf32>
    %cst_7 = arith.constant 0.000000e+00 : f32
    %16 = vector.broadcast %cst_7 : f32 to vector<8x1xf32>
    %17 = arith.maximumf %15, %16 : vector<8x1xf32>
    %18 = vector.shape_cast %17 : vector<8x1xf32> to vector<1x8x1xf32>
    %cst_8 = arith.constant dense<0.000000e+00> : vector<1xf32>
    %19 = vector.multi_reduction <add>, %18, %cst_8 [1, 2] : vector<1x8x1xf32> to vector<1xf32>
    %20 = vector.shape_cast %19 : vector<1xf32> to vector<1x1x1xf32>
    %21 = vector.extract %20[0, 0, 0] : f32 from vector<1x1x1xf32>
    %22 = vector.broadcast %21 : f32 to vector<1x8x128xf32>
    %c0_9 = arith.constant 0 : index
    %c0_10 = arith.constant 0 : index
    %c0_11 = arith.constant 0 : index
    %23 = vector.load %arg4[%c0_9, %c0_10, %c0_11] : memref<1x8x128xf32, #tpu.memory_space<vmem>>, vector<1x8x128xf32>
    tpu.vector_store %arg4[%c0_9, %c0_10, %c0_11], %22 {strides = array<i32>} : memref<1x8x128xf32, #tpu.memory_space<vmem>>, vector<1x8x128xf32>,
    return
  }
  func.func @transform_0(%arg0: i32) -> (i32, i32) {
    %c0_i32 = arith.constant 0 : i32
    %c0_i32_0 = arith.constant 0 : i32
    return %arg0, %c0_i32 : i32, i32
  }
  func.func @transform_1(%arg0: i32) -> (i32, i32) {
    %c0_i32 = arith.constant 0 : i32
    %c0_i32_0 = arith.constant 0 : i32
    return %arg0, %c0_i32 : i32, i32
  }
  func.func @transform_2(%arg0: i32) -> (i32, i32) {
    %c0_i32 = arith.constant 0 : i32
    %c0_i32_0 = arith.constant 0 : i32
    return %arg0, %c0_i32 : i32, i32
  }
  func.func @transform_3(%arg0: i32) -> (i32, i32, i32) {
    %c0_i32 = arith.constant 0 : i32
    %c0_i32_0 = arith.constant 0 : i32
    %c0_i32_1 = arith.constant 0 : i32
    return %arg0, %c0_i32, %c0_i32_0 : i32, i32, i32
  }
}

</mosaic_0001>

<llo_original>
// kernel: tpu_custom_call.1
$region0: #{tpu_custom_call.1}
  #allocation0 [shape = 'u32[]', space=smem, size = 0x4, offset = 0x4, fixed_abs, tag = 'smem constant byte address 0x4 - core index']
  #allocation1 [shape = 'u32[144,128]{1,0:T(1,128)}', space=vmem, size = 0x12000, scoped, tag = 'internal scratch']
  %s0 = inlined_call_operand.hbm [shape: f32[8,32], index: 0, kind: input, shape index: {}]
  %s1 = inlined_call_operand.hbm [shape: f32[8,32], index: 1, kind: input, shape index: {}]
  %s2 = inlined_call_operand.hbm [shape: f32[8,32], index: 2, kind: input, shape index: {}]
  %s3 = inlined_call_operand.hbm [shape: f32[1,8,128], index: 3, kind: output, shape index: {}]
  %s4 = sld [smem:[#allocation0]]
  $region34: #{tpu_custom_call.1} parent=0
    _
  %s6 = ssub.s32 1, %s4
  %s7 = scalar_select 0, %s6, %s4
  $region1: #{tpu_custom_call.1} parent=0
    #allocation2 [shape = 'u8[4096]{0}', space=vmem, size = 0x1000, scoped, tag = 'input window, operand 0, single buffered']
    #allocation3 [shape = 's32[1]{0}', space=sflag, size = 0x4, scoped, tag = 'scoped memory for tpu_custom_call.1']
    #allocation4 [shape = 's32[1]{0}', space=sflag, size = 0x4, scoped, tag = 'scoped memory for tpu_custom_call.1']
    #allocation5 [shape = 'u8[4096]{0}', space=vmem, size = 0x1000, scoped, tag = 'input window, operand 1, single buffered']
    #allocation6 [shape = 's32[1]{0}', space=sflag, size = 0x4, scoped, tag = 'scoped memory for tpu_custom_call.1']
    #allocation7 [shape = 'u8[4096]{0}', space=vmem, size = 0x1000, scoped, tag = 'input window, operand 2, single buffered']
    #allocation8 [shape = 'u8[4096]{0}', space=vmem, size = 0x1000, scoped, tag = 'output window, operand 0, single buffered']
    %8 = vsyncpa [#allocation3], 0
    %9 = vsyncpa [#allocation6], 0
    %10 = vsyncpa [#allocation4], 0
    // Predicated region
    $region2: #{tpu_custom_call.1} parent=1 // pred_check
      _
    $region3: #{tpu_custom_call.1} parent=1 // pred_check_branch
      %12 = sbr.rel (0) target = $region5
    $region4: #{tpu_custom_call.1} parent=1 // pred_region
      %s14 = ssub.s32 128, 128
      %15 = vsyncadd [#allocation3], %s14
      %s17 = sshll.u32 [#allocation2], 4
      %s18 = int_to_ptr.vmem [resolvable:$true] %s17
      %20 = dma.hbm_to_vmem [thread:$0]  %s0, 128, %s18, [#allocation3]
    $region5: #{tpu_custom_call.1} parent=1 // pred_fallthru
      _
    // Predicated region
    $region6: #{tpu_custom_call.1} parent=1 // pred_check
      _
    $region7: #{tpu_custom_call.1} parent=1 // pred_check_branch
      %22 = sbr.rel (0) target = $region9
    $region8: #{tpu_custom_call.1} parent=1 // pred_region
      %s24 = ssub.s32 128, 128
      %25 = vsyncadd [#allocation6], %s24
      %s27 = sshll.u32 [#allocation5], 4
      %s28 = int_to_ptr.vmem [resolvable:$true] %s27
      %30 = dma.hbm_to_vmem [thread:$0]  %s1, 128, %s28, [#allocation6]
    $region9: #{tpu_custom_call.1} parent=1 // pred_fallthru
      _
    // Predicated region
    $region10: #{tpu_custom_call.1} parent=1 // pred_check
      _
    $region11: #{tpu_custom_call.1} parent=1 // pred_check_branch
      %32 = sbr.rel (0) target = $region13
    $region12: #{tpu_custom_call.1} parent=1 // pred_region
      %s34 = ssub.s32 128, 128
      %35 = vsyncadd [#allocation6], %s34
      %s37 = sshll.u32 [#allocation7], 4
      %s38 = int_to_ptr.vmem [resolvable:$true] %s37
      %40 = dma.hbm_to_vmem [thread:$0]  %s2, 128, %s38, [#allocation6]
    $region13: #{tpu_custom_call.1} parent=1 // pred_fallthru
      _
    // Predicated region
    $region14: #{tpu_custom_call.1} parent=1 // pred_check
      _
    $region15: #{tpu_custom_call.1} parent=1 // pred_check_branch
      %42 = sbr.rel (0) target = $region17
    $region16: #{tpu_custom_call.1} parent=1 // pred_region
      %43 = dma.done [#allocation3], 128
    $region17: #{tpu_custom_call.1} parent=1 // pred_fallthru
      _
    // Predicated region
    $region18: #{tpu_custom_call.1} parent=1 // pred_check
      _
    $region19: #{tpu_custom_call.1} parent=1 // pred_check_branch
      %45 = sbr.rel (0) target = $region21
    $region20: #{tpu_custom_call.1} parent=1 // pred_region
      %46 = dma.done [#allocation6], 128
    $region21: #{tpu_custom_call.1} parent=1 // pred_fallthru
      _
    // Predicated region
    $region22: #{tpu_custom_call.1} parent=1 // pred_check
      _
    $region23: #{tpu_custom_call.1} parent=1 // pred_check_branch
      %48 = sbr.rel (0) target = $region25
    $region24: #{tpu_custom_call.1} parent=1 // pred_region
      %49 = dma.done [#allocation6], 128
    $region25: #{tpu_custom_call.1} parent=1 // pred_fallthru
      _
    %v50 = vld [vmem:[#allocation2] sm:$0xff]
    %v51 = vld [vmem:[#allocation5] sm:$0xff]
    %v52 = vld [vmem:[#allocation7] sm:$0xff]
    %v53 = vsub.f32 %v50, %v51
    %v54 = vsub.f32 %v50, %v52
    %v55 = vmul.f32 %v53, %v53
    %vm56 = vcmask 261120
    %v57 = vsel %vm56, %v55, 0.0
    %58 = vadd.xlane.f32.xlu0 %v57
    %v59 = vpop.xlane.xlu0 %58
    %v60 = vmul.f32 %v54, %v54
    %v61 = vsel %vm56, %v60, 0.0
    %62 = vadd.xlane.f32.xlu0 %v61
    %v63 = vpop.xlane.xlu0 %62
    %v64 = vrsqrt.pop %v59
    %v65 = vmul.f32 %v59, %v64
    %vm66 = vcmp.eq.f32.partialorder %v59, inf
    %v67 = vsel %vm66, %v59, %v65
    %vm68 = vcmp.eq.f32.partialorder %v59, 0.0
    %v69 = vand.u32 %v59, 2147483648
    %v70 = vsel %vm68, %v69, %v67
    %v71 = vrsqrt.pop %v63
    %v72 = vmul.f32 %v63, %v71
    %vm73 = vcmp.eq.f32.partialorder %v63, inf
    %v74 = vsel %vm73, %v63, %v72
    %vm75 = vcmp.eq.f32.partialorder %v63, 0.0
    %v76 = vand.u32 %v63, 2147483648
    %v77 = vsel %vm75, %v76, %v74
    %v78 = vsub.f32 %v70, %v77
    %v79 = vadd.f32 %v78, 1.0
    %v80 = vmax.f32 %v79, 0.0
    %vm81 = vcmask 7168
    %v82 = vsel %vm81, %v80, 0.0
    %83 = vadd.xlane.f32.xlu0 %v82
    %v84 = vpop.xlane.xlu0 %83
    %v85 = vrot.slane %v84, 4
    %v86 = vadd.f32 %v84, %v85
    %v87 = vrot.slane %v86, 2
    %v88 = vadd.f32 %v86, %v87
    %v89 = vrot.slane %v88, 1
    %v90 = vadd.f32 %v88, %v89
    %s91 = vtos %v90
    %v92 = vstv %s91
    %93 = vst [vmem:[#allocation8] sm:$0xff] %v92
    // Predicated region
    $region26: #{tpu_custom_call.1} parent=1 // pred_check
      _
    $region27: #{tpu_custom_call.1} parent=1 // pred_check_branch
      %95 = sbr.rel (0) target = $region29
    $region28: #{tpu_custom_call.1} parent=1 // pred_region
      %s97 = ssub.s32 128, 128
      %98 = vsyncadd [#allocation4], %s97
      %s100 = sshll.u32 [#allocation8], 4
      %s101 = int_to_ptr.vmem [resolvable:$true] %s100
      %103 = dma.vmem_to_hbm [thread:$0]  %s101, 128, %s3, [#allocation4]
    $region29: #{tpu_custom_call.1} parent=1 // pred_fallthru
      _
    // Predicated region
    $region30: #{tpu_custom_call.1} parent=1 // pred_check
      _
    $region31: #{tpu_custom_call.1} parent=1 // pred_check_branch
      %105 = sbr.rel (0) target = $region33
    $region32: #{tpu_custom_call.1} parent=1 // pred_region
      %106 = dma.done [#allocation4], 128
    $region33: #{tpu_custom_call.1} parent=1 // pred_fallthru
      _
    %107 = vsyncpa [#allocation3], 1
    %108 = vsyncpa [#allocation6], 1
    %109 = vsyncpa [#allocation4], 1

</llo_original>
